<compile_context>
chip_gen: v6e
topology: v6e:2x2x1
jax: 0.10.0
libtpu: 0.0.40
codegen_flags: <defaults>
</compile_context>

<pallas_src>
import functools

import jax
import jax.numpy as jnp
from jax.experimental import pallas as pl
from jax.experimental.pallas import tpu as pltpu

_LANE = 128
_IN_DIM = 784  # 28 * 28


def _leaky_relu(v, slope=0.2):
    return jnp.where(v >= 0, v, slope * v)


def _round_up(n, m):
    return ((n + m - 1) // m) * m


def _choose_tile_b(B):
    """Batch tile: multiple of 16, <=1024, minimal padding, >=2 tiles for big B."""
    b16 = _round_up(B, 16)
    if b16 <= 256:
        return b16  # one small tile; whole problem is tiny
    candidates = list(range(128, min(1024, b16 // 2) + 1, 16))
    if b16 <= 1024:
        candidates.append(b16)  # single-tile option for mid-size B
    best_t, best_key = None, None
    for t in candidates:
        b_pad = _round_up(b16, t)
        ntiles = b_pad // t
        key = (b_pad - b16,                 # minimal dead (zero-padded) rows
               0 if ntiles >= 2 else 1,     # prefer >=2 tiles (v7x: both TCs busy)
               0 if ntiles >= 4 else 1,     # prefer >=4 tiles (pipeline depth)
               -t)                          # then larger tiles (fewer grid steps)
        if best_key is None or key < best_key:
            best_t, best_key = t, key
    return best_t


def discriminator_kernel(x_ref, w1_ref, w2_ref, w3_ref, w4_ref, b_ref, o_ref):
    n1 = w1_ref.shape[1]
    n2 = w2_ref.shape[1]
    n3 = w3_ref.shape[1]

    # In-kernel f32 -> bf16 cast of x (VPU work, hidden under the x DMA).
    x = x_ref[...].astype(jnp.bfloat16)

    # fc1: (TB, 784) @ (784, 128), bf16 inputs, f32 accumulation on the MXU.
    h = jnp.dot(x, w1_ref[...], preferred_element_type=jnp.float32)
    h = _leaky_relu(h + b_ref[0:1, :n1]).astype(jnp.bfloat16)
    # (dropout == identity at inference)

    # fc2
    h = jnp.dot(h, w2_ref[...], preferred_element_type=jnp.float32)
    h = _leaky_relu(h + b_ref[1:2, :n2]).astype(jnp.bfloat16)

    # fc3
    h = jnp.dot(h, w3_ref[...], preferred_element_type=jnp.float32)
    h = _leaky_relu(h + b_ref[2:3, :n3]).astype(jnp.bfloat16)

    # fc4 (N padded to 128 lanes for a lane-dense store; logit lives in column 0).
    # bf16 store -> half the output writeback HBM traffic.
    o_ref[...] = (jnp.dot(h, w4_ref[...], preferred_element_type=jnp.float32)
                  + b_ref[3:4, :]).astype(o_ref.dtype)


def pack_params(params):
    """One-time packing of weights/biases into kernel-friendly operands."""
    w1, b1 = params["fc1"]
    w2, b2 = params["fc2"]
    w3, b3 = params["fc3"]
    w4, b4 = params["fc4"]
    h1, h2, h3, out_dim = w1.shape[1], w2.shape[1], w3.shape[1], w4.shape[1]
    # The packed (4, 128) bias tile (and 128-lane padded w4) assume width <= 128.
    assert max(h1, h2, h3, out_dim) <= _LANE, "layer widths must be <= 128"
    assert w1.shape[0] == _IN_DIM, "fc1 expects 784 input features"

    w1_b = w1.astype(jnp.bfloat16)
    w2_b = w2.astype(jnp.bfloat16)
    w3_b = w3.astype(jnp.bfloat16)
    w4_p = jnp.zeros((h3, _LANE), jnp.bfloat16).at[:, :out_dim].set(
        w4.astype(jnp.bfloat16))

    bias = jnp.zeros((4, _LANE), jnp.float32)
    bias = bias.at[0, :h1].set(b1.reshape(-1))
    bias = bias.at[1, :h2].set(b2.reshape(-1))
    bias = bias.at[2, :h3].set(b3.reshape(-1))
    bias = bias.at[3, :out_dim].set(b4.reshape(-1))
    return (w1_b, w2_b, w3_b, w4_p, bias)


@functools.partial(jax.jit, static_argnames=("out_dim",))
def discriminator_forward(x_nchw, packed, out_dim=1):
    """x_nchw: (B, 1, 28, 28) float32. packed: result of pack_params(params)."""
    w1_b, w2_b, w3_b, w4_p, bias = packed
    B = x_nchw.shape[0]
    x = x_nchw.reshape(B, _IN_DIM).astype(jnp.float32)  # == torch .view(-1, 784)

    tile_b = _choose_tile_b(B)
    b_pad = _round_up(B, tile_b)
    if b_pad != B:  # pad ragged last batch tile only (no full pad/cast pass)
        x = jnp.pad(x, ((0, b_pad - B), (0, 0)))

    const = lambda arr: pl.BlockSpec(arr.shape, lambda i: (0, 0))

    out = pl.pallas_call(
        discriminator_kernel,
        out_shape=jax.ShapeDtypeStruct((b_pad, _LANE), jnp.bfloat16),
        grid=(b_pad // tile_b,),
        in_specs=[
            # x batch tiles, raw f32; last dim == full array dim (784) so no 128-pad
            pl.BlockSpec((tile_b, _IN_DIM), lambda i: (i, 0)),
            const(w1_b),   # weights/biases: constant index_map -> VMEM-resident
            const(w2_b),
            const(w3_b),
            const(w4_p),
            const(bias),
        ],
        out_specs=pl.BlockSpec((tile_b, _LANE), lambda i: (i, 0)),
        compiler_params=pltpu.CompilerParams(
            # batch tiles are independent -> shard across v7x's 2 TensorCores
            dimension_semantics=("parallel",)),
        # NOTE: tile_b<=1024 keeps double-buffered working set <~8 MiB, below the
        # default scoped-VMEM limit on v5e/v6e/v7x -> no vmem_limit_bytes needed.
    )(x, w1_b, w2_b, w3_b, w4_p, bias)

    return out[:B, :out_dim].astype(jnp.float32)


def init_params(key, input_size=784, hidden_dim=32, output_size=1):
    """Deterministic init mimicking nn.Linear default (uniform +/- 1/sqrt(fan_in))."""
    dims = [
        (input_size, hidden_dim * 4),      # fc1
        (hidden_dim * 4, hidden_dim * 2),  # fc2
        (hidden_dim * 2, hidden_dim),      # fc3
        (hidden_dim, output_size),         # fc4
    ]
    names = ["fc1", "fc2", "fc3", "fc4"]
    params = {}
    for name, (fan_in, fan_out) in zip(names, dims):
        key, kw, kb = jax.random.split(key, 3)
        bound = 1.0 / jnp.sqrt(fan_in)
        # stored as (in, out) for h @ W; bias kept 2-D (1, out)
        w = jax.random.uniform(kw, (fan_in, fan_out), jnp.float32,
                               minval=-bound, maxval=bound)
        b = jax.random.uniform(kb, (1, fan_out), jnp.float32,
                               minval=-bound, maxval=bound)
        params[name] = (w, b)
    return params


def reference_forward_f32(x_nchw, params):
    """Pure-JAX f32 reference (matches the PyTorch module exactly, eval mode)."""
    x = x_nchw.reshape(x_nchw.shape[0], _IN_DIM)
    h = x
    for name in ["fc1", "fc2", "fc3"]:
        w, b = params[name]
        h = _leaky_relu(h @ w + b)
    w, b = params["fc4"]
    return h @ w + b


def reference_forward_bf16(x_nchw, params):
    """Pure-JAX reference mirroring the kernel's bf16-input / f32-accum math."""
    h = x_nchw.reshape(x_nchw.shape[0], _IN_DIM).astype(jnp.bfloat16)
    for name in ["fc1", "fc2", "fc3"]:
        w, b = params[name]
        acc = jnp.dot(h, w.astype(jnp.bfloat16),
                      preferred_element_type=jnp.float32)
        h = _leaky_relu(acc + b).astype(jnp.bfloat16)
    w, b = params["fc4"]
    return jnp.dot(h, w.astype(jnp.bfloat16),
                   preferred_element_type=jnp.float32) + b


if __name__ == "__main__":
    key = jax.random.PRNGKey(0)
    key, k_x, k_p = jax.random.split(key, 3)

    B, hidden_dim, output_size = 8, 32, 1
    x = jax.random.normal(k_x, (B, 1, 28, 28), jnp.float32)  # NCHW, MNIST-sized
    params = init_params(k_p, input_size=784, hidden_dim=hidden_dim,
                         output_size=output_size)
    packed = pack_params(params)  # one-time packing, outside the per-call path

    out = discriminator_forward(x, packed, out_dim=output_size)
    out = jax.block_until_ready(out)
    assert out.shape == (B, output_size), out.shape

    # Check vs a reference mirroring the kernel's bf16/f32 mixed precision
    # (kernel additionally rounds the final logit to bf16 for the writeback).
    ref_bf16 = reference_forward_bf16(x, params)
    assert jnp.allclose(out, ref_bf16, atol=1e-2, rtol=1e-2), "mismatch vs bf16 ref"

    # Loose sanity check vs the exact f32 PyTorch-equivalent math.
    ref_f32 = reference_forward_f32(x, params)
    assert jnp.allclose(out, ref_f32, atol=5e-2, rtol=5e-2), "mismatch vs f32 ref"

    print("KERNEL_OK")
</pallas_src>

<mosaic_0001>
module attributes {stable_mosaic.version = 11 : i64} {
  func.func @discriminator_kernel(%arg0: i32, %arg1: memref<16x784xf32, #tpu.memory_space<vmem>>, %arg2: memref<784x128xbf16, #tpu.memory_space<vmem>>, %arg3: memref<128x64xbf16, #tpu.memory_space<vmem>>, %arg4: memref<64x32xbf16, #tpu.memory_space<vmem>>, %arg5: memref<32x128xbf16, #tpu.memory_space<vmem>>, %arg6: memref<4x128xf32, #tpu.memory_space<vmem>>, %arg7: memref<16x128xbf16, #tpu.memory_space<vmem>>) attributes {dimension_semantics = [#tpu.dimension_semantics<parallel>], iteration_bounds = array<i64: 1>, scalar_prefetch = 0 : i64, scratch_operands = 0 : i64, tpu.core_type = #tpu.core_type<tc>, window_params = [{transform_indices = @transform_0, window_bounds = array<i64: 16, 784>}, {pipeline_mode = #tpu.pipeline_mode<synchronous>, transform_indices = @transform_1, window_bounds = array<i64: 784, 128>}, {pipeline_mode = #tpu.pipeline_mode<synchronous>, transform_indices = @transform_2, window_bounds = array<i64: 128, 64>}, {pipeline_mode = #tpu.pipeline_mode<synchronous>, transform_indices = @transform_3, window_bounds = array<i64: 64, 32>}, {pipeline_mode = #tpu.pipeline_mode<synchronous>, transform_indices = @transform_4, window_bounds = array<i64: 32, 128>}, {pipeline_mode = #tpu.pipeline_mode<synchronous>, transform_indices = @transform_5, window_bounds = array<i64: 4, 128>}, {transform_indices = @transform_6, window_bounds = array<i64: 16, 128>}]} {
    %c0 = arith.constant 0 : index
    %c0_0 = arith.constant 0 : index
    %0 = vector.load %arg1[%c0, %c0_0] : memref<16x784xf32, #tpu.memory_space<vmem>>, vector<16x784xf32>
    %1 = arith.truncf %0 : vector<16x784xf32> to vector<16x784xbf16>
    %c0_1 = arith.constant 0 : index
    %c0_2 = arith.constant 0 : index
    %2 = vector.load %arg2[%c0_1, %c0_2] : memref<784x128xbf16, #tpu.memory_space<vmem>>, vector<784x128xbf16>
    %cst = arith.constant dense<0.000000e+00> : vector<16x128xf32>
    %3 = tpu.matmul %1, %2, %cst {dimension_numbers = #tpu.dot_dimension_numbers<[1], [0], [0], [1], [0, 0, 1, 1], [], []>} : vector<16x784xbf16>, vector<784x128xbf16>, vector<16x128xf32> -> vector<16x128xf32>
    %c0_3 = arith.constant 0 : index
    %c0_4 = arith.constant 0 : index
    %4 = vector.load %arg6[%c0_3, %c0_4] : memref<4x128xf32, #tpu.memory_space<vmem>>, vector<1x128xf32>
    %5 = vector.broadcast %4 : vector<1x128xf32> to vector<16x128xf32>
    %6 = arith.addf %3, %5 : vector<16x128xf32>
    %cst_5 = arith.constant 0.000000e+00 : f32
    %7 = vector.broadcast %cst_5 : f32 to vector<16x128xf32>
    %8 = arith.cmpf oge, %6, %7 : vector<16x128xf32>
    %cst_6 = arith.constant 2.000000e-01 : f32
    %9 = vector.broadcast %cst_6 : f32 to vector<16x128xf32>
    %10 = arith.mulf %9, %6 : vector<16x128xf32>
    %11 = arith.select %8, %6, %10 : vector<16x128xi1>, vector<16x128xf32>
    %12 = arith.truncf %11 : vector<16x128xf32> to vector<16x128xbf16>
    %c0_7 = arith.constant 0 : index
    %c0_8 = arith.constant 0 : index
    %13 = vector.load %arg3[%c0_7, %c0_8] : memref<128x64xbf16, #tpu.memory_space<vmem>>, vector<128x64xbf16>
    %cst_9 = arith.constant dense<0.000000e+00> : vector<16x64xf32>
    %14 = tpu.matmul %12, %13, %cst_9 {dimension_numbers = #tpu.dot_dimension_numbers<[1], [0], [0], [1], [0, 0, 1, 1], [], []>} : vector<16x128xbf16>, vector<128x64xbf16>, vector<16x64xf32> -> vector<16x64xf32>
    %c1 = arith.constant 1 : index
    %c0_10 = arith.constant 0 : index
    %15 = vector.load %arg6[%c1, %c0_10] : memref<4x128xf32, #tpu.memory_space<vmem>>, vector<1x64xf32>
    %16 = vector.broadcast %15 : vector<1x64xf32> to vector<16x64xf32>
    %17 = arith.addf %14, %16 : vector<16x64xf32>
    %cst_11 = arith.constant 0.000000e+00 : f32
    %18 = vector.broadcast %cst_11 : f32 to vector<16x64xf32>
    %19 = arith.cmpf oge, %17, %18 : vector<16x64xf32>
    %cst_12 = arith.constant 2.000000e-01 : f32
    %20 = vector.broadcast %cst_12 : f32 to vector<16x64xf32>
    %21 = arith.mulf %20, %17 : vector<16x64xf32>
    %22 = arith.select %19, %17, %21 : vector<16x64xi1>, vector<16x64xf32>
    %23 = arith.truncf %22 : vector<16x64xf32> to vector<16x64xbf16>
    %c0_13 = arith.constant 0 : index
    %c0_14 = arith.constant 0 : index
    %24 = vector.load %arg4[%c0_13, %c0_14] : memref<64x32xbf16, #tpu.memory_space<vmem>>, vector<64x32xbf16>
    %cst_15 = arith.constant dense<0.000000e+00> : vector<16x32xf32>
    %25 = tpu.matmul %23, %24, %cst_15 {dimension_numbers = #tpu.dot_dimension_numbers<[1], [0], [0], [1], [0, 0, 1, 1], [], []>} : vector<16x64xbf16>, vector<64x32xbf16>, vector<16x32xf32> -> vector<16x32xf32>
    %c2 = arith.constant 2 : index
    %c0_16 = arith.constant 0 : index
    %26 = vector.load %arg6[%c2, %c0_16] : memref<4x128xf32, #tpu.memory_space<vmem>>, vector<1x32xf32>
    %27 = vector.broadcast %26 : vector<1x32xf32> to vector<16x32xf32>
    %28 = arith.addf %25, %27 : vector<16x32xf32>
    %cst_17 = arith.constant 0.000000e+00 : f32
    %29 = vector.broadcast %cst_17 : f32 to vector<16x32xf32>
    %30 = arith.cmpf oge, %28, %29 : vector<16x32xf32>
    %cst_18 = arith.constant 2.000000e-01 : f32
    %31 = vector.broadcast %cst_18 : f32 to vector<16x32xf32>
    %32 = arith.mulf %31, %28 : vector<16x32xf32>
    %33 = arith.select %30, %28, %32 : vector<16x32xi1>, vector<16x32xf32>
    %34 = arith.truncf %33 : vector<16x32xf32> to vector<16x32xbf16>
    %c0_19 = arith.constant 0 : index
    %c0_20 = arith.constant 0 : index
    %35 = vector.load %arg5[%c0_19, %c0_20] : memref<32x128xbf16, #tpu.memory_space<vmem>>, vector<32x128xbf16>
    %cst_21 = arith.constant dense<0.000000e+00> : vector<16x128xf32>
    %36 = tpu.matmul %34, %35, %cst_21 {dimension_numbers = #tpu.dot_dimension_numbers<[1], [0], [0], [1], [0, 0, 1, 1], [], []>} : vector<16x32xbf16>, vector<32x128xbf16>, vector<16x128xf32> -> vector<16x128xf32>
    %c3 = arith.constant 3 : index
    %c0_22 = arith.constant 0 : index
    %37 = vector.load %arg6[%c3, %c0_22] : memref<4x128xf32, #tpu.memory_space<vmem>>, vector<1x128xf32>
    %38 = vector.broadcast %37 : vector<1x128xf32> to vector<16x128xf32>
    %39 = arith.addf %36, %38 : vector<16x128xf32>
    %40 = arith.truncf %39 : vector<16x128xf32> to vector<16x128xbf16>
    %c0_23 = arith.constant 0 : index
    %c0_24 = arith.constant 0 : index
    %41 = vector.load %arg7[%c0_23, %c0_24] : memref<16x128xbf16, #tpu.memory_space<vmem>>, vector<16x128xbf16>
    tpu.vector_store %arg7[%c0_23, %c0_24], %40 {strides = array<i32>} : memref<16x128xbf16, #tpu.memory_space<vmem>>, vector<16x128xbf16>,
    return
  }
  func.func @transform_0(%arg0: i32) -> (i32, i32) {
    %c0_i32 = arith.constant 0 : i32
    %c0_i32_0 = arith.constant 0 : i32
    return %arg0, %c0_i32 : i32, i32
  }
  func.func @transform_1(%arg0: i32) -> (i32, i32) {
    %c0_i32 = arith.constant 0 : i32
    %c0_i32_0 = arith.constant 0 : i32
    %c0_i32_1 = arith.constant 0 : i32
    return %c0_i32, %c0_i32_0 : i32, i32
  }
  func.func @transform_2(%arg0: i32) -> (i32, i32) {
    %c0_i32 = arith.constant 0 : i32
    %c0_i32_0 = arith.constant 0 : i32
    %c0_i32_1 = arith.constant 0 : i32
    return %c0_i32, %c0_i32_0 : i32, i32
  }
  func.func @transform_3(%arg0: i32) -> (i32, i32) {
    %c0_i32 = arith.constant 0 : i32
    %c0_i32_0 = arith.constant 0 : i32
    %c0_i32_1 = arith.constant 0 : i32
    return %c0_i32, %c0_i32_0 : i32, i32
  }
  func.func @transform_4(%arg0: i32) -> (i32, i32) {
    %c0_i32 = arith.constant 0 : i32
    %c0_i32_0 = arith.constant 0 : i32
    %c0_i32_1 = arith.constant 0 : i32
    return %c0_i32, %c0_i32_0 : i32, i32
  }
  func.func @transform_5(%arg0: i32) -> (i32, i32) {
    %c0_i32 = arith.constant 0 : i32
    %c0_i32_0 = arith.constant 0 : i32
    %c0_i32_1 = arith.constant 0 : i32
    return %c0_i32, %c0_i32_0 : i32, i32
  }
  func.func @transform_6(%arg0: i32) -> (i32, i32) {
    %c0_i32 = arith.constant 0 : i32
    %c0_i32_0 = arith.constant 0 : i32
    return %arg0, %c0_i32 : i32, i32
  }
}

</mosaic_0001>

<llo_original>
// kernel: discriminator_forward.1
$region0: #{discriminator_forward.1}
  #allocation0 [shape = 'u32[]', space=smem, size = 0x4, offset = 0x4, fixed_abs, tag = 'smem constant byte address 0x4 - core index']
  #allocation1 [shape = 'u32[144,128]{1,0:T(1,128)}', space=vmem, size = 0x12000, scoped, tag = 'internal scratch']
  %s0 = inlined_call_operand.vmem [shape: f32[16,784], index: 0, kind: input, shape index: {}]
  %s1 = inlined_call_operand.vmem [shape: bf16[784,128], index: 1, kind: input, shape index: {}]
  %s2 = inlined_call_operand.vmem [shape: bf16[128,64], index: 2, kind: input, shape index: {}]
  %s3 = inlined_call_operand.vmem [shape: bf16[64,32], index: 3, kind: input, shape index: {}]
  %s4 = inlined_call_operand.vmem [shape: bf16[32,128], index: 4, kind: input, shape index: {}]
  %s5 = inlined_call_operand.vmem [shape: f32[4,128], index: 5, kind: input, shape index: {}]
  %s6 = inlined_call_operand.vmem [shape: bf16[16,128], index: 6, kind: output, shape index: {}]
  %s7 = sld [smem:[#allocation0]]
  $region34: #{discriminator_forward.1} parent=0
    _
  %s9 = ssub.s32 1, %s7
  %s10 = scalar_select 0, %s9, %s7
  // Predicated region
  $region2: #{discriminator_forward.1} parent=0 // pred_check
    _
  $region3: #{discriminator_forward.1} parent=0 // pred_check_branch
    %12 = sbr.rel (0) target = $region5
  $region4: #{discriminator_forward.1} parent=0 // pred_region
    _
  $region5: #{discriminator_forward.1} parent=0 // pred_fallthru
    _
  // Predicated region
  $region6: #{discriminator_forward.1} parent=0 // pred_check
    _
  $region7: #{discriminator_forward.1} parent=0 // pred_check_branch
    %14 = sbr.rel (0) target = $region9
  $region8: #{discriminator_forward.1} parent=0 // pred_region
    _
  $region9: #{discriminator_forward.1} parent=0 // pred_fallthru
    _
  // Predicated region
  $region10: #{discriminator_forward.1} parent=0 // pred_check
    _
  $region11: #{discriminator_forward.1} parent=0 // pred_check_branch
    %16 = sbr.rel (0) target = $region13
  $region12: #{discriminator_forward.1} parent=0 // pred_region
    _
  $region13: #{discriminator_forward.1} parent=0 // pred_fallthru
    _
  // Predicated region
  $region14: #{discriminator_forward.1} parent=0 // pred_check
    _
  $region15: #{discriminator_forward.1} parent=0 // pred_check_branch
    %18 = sbr.rel (0) target = $region17
  $region16: #{discriminator_forward.1} parent=0 // pred_region
    _
  $region17: #{discriminator_forward.1} parent=0 // pred_fallthru
    _
  // Predicated region
  $region18: #{discriminator_forward.1} parent=0 // pred_check
    _
  $region19: #{discriminator_forward.1} parent=0 // pred_check_branch
    %20 = sbr.rel (0) target = $region21
  $region20: #{discriminator_forward.1} parent=0 // pred_region
    _
  $region21: #{discriminator_forward.1} parent=0 // pred_fallthru
    _
  // Predicated region
  $region22: #{discriminator_forward.1} parent=0 // pred_check
    _
  $region23: #{discriminator_forward.1} parent=0 // pred_check_branch
    %22 = sbr.rel (0) target = $region25
  $region24: #{discriminator_forward.1} parent=0 // pred_region
    _
  $region25: #{discriminator_forward.1} parent=0 // pred_fallthru
    _
  %v24 = vld [vmem:[%s0] sm:$0xff]
  %v25 = vld [vmem:[%s0 + $0x8] sm:$0xff]
  %v26 = vld [vmem:[%s0 + $0x10] sm:$0xff]
  %v27 = vld [vmem:[%s0 + $0x18] sm:$0xff]
  %v28 = vld [vmem:[%s0 + $0x20] sm:$0xff]
  %v29 = vld [vmem:[%s0 + $0x28] sm:$0xff]
  %v30 = vld [vmem:[%s0 + $0x30] sm:$0xff]
  %v31 = vld [vmem:[%s0 + $0x38] sm:$0xff]
  %v32 = vld [vmem:[%s0 + $0x40] sm:$0xff]
  %v33 = vld [vmem:[%s0 + $0x48] sm:$0xff]
  %v34 = vld [vmem:[%s0 + $0x50] sm:$0xff]
  %v35 = vld [vmem:[%s0 + $0x58] sm:$0xff]
  %v36 = vld [vmem:[%s0 + $0x60] sm:$0xff]
  %v37 = vld [vmem:[%s0 + $0x68] sm:$0xff]
  %v38 = vpack.c.bf16 %v31, %v24
  %v39 = vpack.c.bf16 %v32, %v25
  %v40 = vpack.c.bf16 %v33, %v26
  %v41 = vpack.c.bf16 %v34, %v27
  %v42 = vpack.c.bf16 %v35, %v28
  %v43 = vpack.c.bf16 %v36, %v29
  %v44 = vpack.c.bf16 %v37, %v30
  %v45 = vld [vmem:[%s1] sm:$0xf]
  %v46 = vld [vmem:[%s1 + $0x4] sm:$0xf]
  %v47 = vld [vmem:[%s1 + $0x8] sm:$0xf]
  %v48 = vld [vmem:[%s1 + $0xc] sm:$0xf]
  %v49 = vld [vmem:[%s1 + $0x10] sm:$0xf]
  %v50 = vld [vmem:[%s1 + $0x14] sm:$0xf]
  %v51 = vld [vmem:[%s1 + $0x18] sm:$0xf]
  %v52 = vld [vmem:[%s1 + $0x1c] sm:$0xf]
  %v53 = vld [vmem:[%s1 + $0x20] sm:$0xf]
  %v54 = vld [vmem:[%s1 + $0x24] sm:$0xf]
  %v55 = vld [vmem:[%s1 + $0x28] sm:$0xf]
  %v56 = vld [vmem:[%s1 + $0x2c] sm:$0xf]
  %v57 = vld [vmem:[%s1 + $0x30] sm:$0xf]
  %v58 = vld [vmem:[%s1 + $0x34] sm:$0xf]
  %v59 = vld [vmem:[%s1 + $0x38] sm:$0xf]
  %v60 = vld [vmem:[%s1 + $0x3c] sm:$0xf]
  %v61 = vld [vmem:[%s1 + $0x40] sm:$0xf]
  %v62 = vld [vmem:[%s1 + $0x44] sm:$0xf]
  %v63 = vld [vmem:[%s1 + $0x48] sm:$0xf]
  %v64 = vld [vmem:[%s1 + $0x4c] sm:$0xf]
  %v65 = vld [vmem:[%s1 + $0x50] sm:$0xf]
  %v66 = vld [vmem:[%s1 + $0x54] sm:$0xf]
  %v67 = vld [vmem:[%s1 + $0x58] sm:$0xf]
  %v68 = vld [vmem:[%s1 + $0x5c] sm:$0xf]
  %v69 = vld [vmem:[%s1 + $0x60] sm:$0xf]
  %v70 = vld [vmem:[%s1 + $0x64] sm:$0xf]
  %v71 = vld [vmem:[%s1 + $0x68] sm:$0xf]
  %v72 = vld [vmem:[%s1 + $0x6c] sm:$0xf]
  %v73 = vld [vmem:[%s1 + $0x70] sm:$0xf]
  %v74 = vld [vmem:[%s1 + $0x74] sm:$0xf]
  %v75 = vld [vmem:[%s1 + $0x78] sm:$0xf]
  %v76 = vld [vmem:[%s1 + $0x7c] sm:$0xf]
  %v77 = vld [vmem:[%s1 + $0x80] sm:$0xf]
  %v78 = vld [vmem:[%s1 + $0x84] sm:$0xf]
  %v79 = vld [vmem:[%s1 + $0x88] sm:$0xf]
  %v80 = vld [vmem:[%s1 + $0x8c] sm:$0xf]
  %v81 = vld [vmem:[%s1 + $0x90] sm:$0xf]
  %v82 = vld [vmem:[%s1 + $0x94] sm:$0xf]
  %v83 = vld [vmem:[%s1 + $0x98] sm:$0xf]
  %v84 = vld [vmem:[%s1 + $0x9c] sm:$0xf]
  %v85 = vld [vmem:[%s1 + $0xa0] sm:$0xf]
  %v86 = vld [vmem:[%s1 + $0xa4] sm:$0xf]
  %v87 = vld [vmem:[%s1 + $0xa8] sm:$0xf]
  %v88 = vld [vmem:[%s1 + $0xac] sm:$0xf]
  %v89 = vld [vmem:[%s1 + $0xb0] sm:$0xf]
  %v90 = vld [vmem:[%s1 + $0xb4] sm:$0xf]
  %v91 = vld [vmem:[%s1 + $0xb8] sm:$0xf]
  %v92 = vld [vmem:[%s1 + $0xbc] sm:$0xf]
  %v93 = vld [vmem:[%s1 + $0xc0] sm:$0xf]
  %v94 = vld [vmem:[%s1 + $0xc4] sm:$0xf]
  %v95 = vld [vmem:[%s1 + $0xc8] sm:$0xf]
  %v96 = vld [vmem:[%s1 + $0xcc] sm:$0xf]
  %v97 = vld [vmem:[%s1 + $0xd0] sm:$0xf]
  %v98 = vld [vmem:[%s1 + $0xd4] sm:$0xf]
  %v99 = vld [vmem:[%s1 + $0xd8] sm:$0xf]
  %v100 = vld [vmem:[%s1 + $0xdc] sm:$0xf]
  %v101 = vld [vmem:[%s1 + $0xe0] sm:$0xf]
  %v102 = vld [vmem:[%s1 + $0xe4] sm:$0xf]
  %v103 = vld [vmem:[%s1 + $0xe8] sm:$0xf]
  %v104 = vld [vmem:[%s1 + $0xec] sm:$0xf]
  %v105 = vld [vmem:[%s1 + $0xf0] sm:$0xf]
  %v106 = vld [vmem:[%s1 + $0xf4] sm:$0xf]
  %v107 = vld [vmem:[%s1 + $0xf8] sm:$0xf]
  %v108 = vld [vmem:[%s1 + $0xfc] sm:$0xf]
  %v109 = vld [vmem:[%s1 + $0x100] sm:$0xf]
  %v110 = vld [vmem:[%s1 + $0x104] sm:$0xf]
  %v111 = vld [vmem:[%s1 + $0x108] sm:$0xf]
  %v112 = vld [vmem:[%s1 + $0x10c] sm:$0xf]
  %v113 = vld [vmem:[%s1 + $0x110] sm:$0xf]
  %v114 = vld [vmem:[%s1 + $0x114] sm:$0xf]
  %v115 = vld [vmem:[%s1 + $0x118] sm:$0xf]
  %v116 = vld [vmem:[%s1 + $0x11c] sm:$0xf]
  %v117 = vld [vmem:[%s1 + $0x120] sm:$0xf]
  %v118 = vld [vmem:[%s1 + $0x124] sm:$0xf]
  %v119 = vld [vmem:[%s1 + $0x128] sm:$0xf]
  %v120 = vld [vmem:[%s1 + $0x12c] sm:$0xf]
  %v121 = vld [vmem:[%s1 + $0x130] sm:$0xf]
  %v122 = vld [vmem:[%s1 + $0x134] sm:$0xf]
  %v123 = vld [vmem:[%s1 + $0x138] sm:$0xf]
  %v124 = vld [vmem:[%s1 + $0x13c] sm:$0xf]
  %v125 = vld [vmem:[%s1 + $0x140] sm:$0xf]
  %v126 = vld [vmem:[%s1 + $0x144] sm:$0xf]
  %v127 = vld [vmem:[%s1 + $0x148] sm:$0xf]
  %v128 = vld [vmem:[%s1 + $0x14c] sm:$0xf]
  %v129 = vld [vmem:[%s1 + $0x150] sm:$0xf]
  %v130 = vld [vmem:[%s1 + $0x154] sm:$0xf]
  %v131 = vld [vmem:[%s1 + $0x158] sm:$0xf]
  %v132 = vld [vmem:[%s1 + $0x15c] sm:$0xf]
  %v133 = vld [vmem:[%s1 + $0x160] sm:$0xf]
  %v134 = vld [vmem:[%s1 + $0x164] sm:$0xf]
  %v135 = vld [vmem:[%s1 + $0x168] sm:$0xf]
  %v136 = vld [vmem:[%s1 + $0x16c] sm:$0xf]
  %v137 = vld [vmem:[%s1 + $0x170] sm:$0xf]
  %v138 = vld [vmem:[%s1 + $0x174] sm:$0xf]
  %v139 = vld [vmem:[%s1 + $0x178] sm:$0xf]
  %v140 = vld [vmem:[%s1 + $0x17c] sm:$0xf]
  %v141 = vld [vmem:[%s1 + $0x180] sm:$0xf]
  %v142 = vld [vmem:[%s1 + $0x184] sm:$0xf]
  %v143 = vld [vmem:[%s5] sm:$0x1]
  %v144 = vlaneseq
  %v145 = vshrl.u32 %v144, 7
  %v146 = vsub.s32 0, %v145
  %v147 = vrot.slane %v143, %v146
  %v246 = vunpack.c.l.b16 %v45
  %v247 = vunpack.c.l.b16 %v46
  %v248 = vunpack.c.l.b16 %v47
  %v249 = vunpack.c.l.b16 %v48
  %v250 = vunpack.c.l.b16 %v49
  %v251 = vunpack.c.l.b16 %v50
  %v252 = vunpack.c.l.b16 %v51
  %v253 = vunpack.c.l.b16 %v52
  %v254 = vunpack.c.l.b16 %v53
  %v255 = vunpack.c.l.b16 %v54
  %v256 = vunpack.c.l.b16 %v55
  %v257 = vunpack.c.l.b16 %v56
  %v258 = vunpack.c.l.b16 %v57
  %v259 = vunpack.c.l.b16 %v58
  %v260 = vunpack.c.l.b16 %v59
  %v261 = vunpack.c.l.b16 %v60
  %v262 = vunpack.c.l.b16 %v61
  %v263 = vunpack.c.l.b16 %v62
  %v264 = vunpack.c.l.b16 %v63
  %v265 = vunpack.c.l.b16 %v64
  %v266 = vunpack.c.l.b16 %v65
  %v267 = vunpack.c.l.b16 %v66
  %v268 = vunpack.c.l.b16 %v67
  %v269 = vunpack.c.l.b16 %v68
  %v270 = vunpack.c.l.b16 %v69
  %v271 = vunpack.c.l.b16 %v70
  %v272 = vunpack.c.l.b16 %v71
  %v273 = vunpack.c.l.b16 %v72
  %v274 = vunpack.c.l.b16 %v73
  %v275 = vunpack.c.l.b16 %v74
  %v276 = vunpack.c.l.b16 %v75
  %v277 = vunpack.c.l.b16 %v76
  %v278 = vunpack.c.l.b16 %v77
  %v279 = vunpack.c.l.b16 %v78
  %v280 = vunpack.c.l.b16 %v79
  %v281 = vunpack.c.l.b16 %v80
  %v282 = vunpack.c.l.b16 %v81
  %v283 = vunpack.c.l.b16 %v82
  %v284 = vunpack.c.l.b16 %v83
  %v285 = vunpack.c.l.b16 %v84
  %v286 = vunpack.c.l.b16 %v85
  %v287 = vunpack.c.l.b16 %v86
  %v288 = vunpack.c.l.b16 %v87
  %v289 = vunpack.c.l.b16 %v88
  %v290 = vunpack.c.l.b16 %v89
  %v291 = vunpack.c.l.b16 %v90
  %v292 = vunpack.c.l.b16 %v91
  %v293 = vunpack.c.l.b16 %v92
  %v294 = vunpack.c.l.b16 %v93
  %v295 = vunpack.c.l.b16 %v94
  %v296 = vunpack.c.l.b16 %v95
  %v297 = vunpack.c.l.b16 %v96
  %v298 = vunpack.c.l.b16 %v97
  %v299 = vunpack.c.l.b16 %v98
  %v300 = vunpack.c.l.b16 %v99
  %v301 = vunpack.c.l.b16 %v100
  %v302 = vunpack.c.l.b16 %v101
  %v303 = vunpack.c.l.b16 %v102
  %v304 = vunpack.c.l.b16 %v103
  %v305 = vunpack.c.l.b16 %v104
  %v306 = vunpack.c.l.b16 %v105
  %v307 = vunpack.c.l.b16 %v106
  %v308 = vunpack.c.l.b16 %v107
  %v309 = vunpack.c.l.b16 %v108
  %v310 = vunpack.c.l.b16 %v109
  %v311 = vunpack.c.l.b16 %v110
  %v312 = vunpack.c.l.b16 %v111
  %v313 = vunpack.c.l.b16 %v112
  %v314 = vunpack.c.l.b16 %v113
  %v315 = vunpack.c.l.b16 %v114
  %v316 = vunpack.c.l.b16 %v115
  %v317 = vunpack.c.l.b16 %v116
  %v318 = vunpack.c.l.b16 %v117
  %v319 = vunpack.c.l.b16 %v118
  %v320 = vunpack.c.l.b16 %v119
  %v321 = vunpack.c.l.b16 %v120
  %v322 = vunpack.c.l.b16 %v121
  %v323 = vunpack.c.l.b16 %v122
  %v324 = vunpack.c.l.b16 %v123
  %v325 = vunpack.c.l.b16 %v124
  %v326 = vunpack.c.l.b16 %v125
  %v327 = vunpack.c.l.b16 %v126
  %v328 = vunpack.c.l.b16 %v127
  %v329 = vunpack.c.l.b16 %v128
  %v330 = vunpack.c.l.b16 %v129
  %v331 = vunpack.c.l.b16 %v130
  %v332 = vunpack.c.l.b16 %v131
  %v333 = vunpack.c.l.b16 %v132
  %v334 = vunpack.c.l.b16 %v133
  %v335 = vunpack.c.l.b16 %v134
  %v336 = vunpack.c.l.b16 %v135
  %v337 = vunpack.c.l.b16 %v136
  %v338 = vunpack.c.l.b16 %v137
  %v339 = vunpack.c.l.b16 %v138
  %v340 = vunpack.c.l.b16 %v139
  %v341 = vunpack.c.l.b16 %v140
  %v342 = vunpack.c.l.b16 %v141
  %v343 = vunpack.c.l.b16 %v142
  %v344 = vpack.c.b16 %v247, %v246
  %v345 = vpack.c.b16 %v249, %v248
  %v346 = vpack.c.b16 %v251, %v250
  %v347 = vpack.c.b16 %v253, %v252
  %v348 = vpack.c.b16 %v255, %v254
  %v349 = vpack.c.b16 %v257, %v256
  %v350 = vpack.c.b16 %v259, %v258
  %v351 = vpack.c.b16 %v261, %v260
  %v352 = vpack.c.b16 %v263, %v262
  %v353 = vpack.c.b16 %v265, %v264
  %v354 = vpack.c.b16 %v267, %v266
  %v355 = vpack.c.b16 %v269, %v268
  %v356 = vpack.c.b16 %v271, %v270
  %v357 = vpack.c.b16 %v273, %v272
  %v358 = vpack.c.b16 %v275, %v274
  %v359 = vpack.c.b16 %v277, %v276
  %v360 = vpack.c.b16 %v279, %v278
  %v361 = vpack.c.b16 %v281, %v280
  %v362 = vpack.c.b16 %v283, %v282
  %v363 = vpack.c.b16 %v285, %v284
  %v364 = vpack.c.b16 %v287, %v286
  %v365 = vpack.c.b16 %v289, %v288
  %v366 = vpack.c.b16 %v291, %v290
  %v367 = vpack.c.b16 %v293, %v292
  %v368 = vpack.c.b16 %v295, %v294
  %v369 = vpack.c.b16 %v297, %v296
  %v370 = vpack.c.b16 %v299, %v298
  %v371 = vpack.c.b16 %v301, %v300
  %v372 = vpack.c.b16 %v303, %v302
  %v373 = vpack.c.b16 %v305, %v304
  %v374 = vpack.c.b16 %v307, %v306
  %v375 = vpack.c.b16 %v309, %v308
  %v376 = vpack.c.b16 %v311, %v310
  %v377 = vpack.c.b16 %v313, %v312
  %v378 = vpack.c.b16 %v315, %v314
  %v379 = vpack.c.b16 %v317, %v316
  %v380 = vpack.c.b16 %v319, %v318
  %v381 = vpack.c.b16 %v321, %v320
  %v382 = vpack.c.b16 %v323, %v322
  %v383 = vpack.c.b16 %v325, %v324
  %v384 = vpack.c.b16 %v327, %v326
  %v385 = vpack.c.b16 %v329, %v328
  %v386 = vpack.c.b16 %v331, %v330
  %v387 = vpack.c.b16 %v333, %v332
  %v388 = vpack.c.b16 %v335, %v334
  %v389 = vpack.c.b16 %v337, %v336
  %v390 = vpack.c.b16 %v339, %v338
  %v391 = vpack.c.b16 %v341, %v340
  %v392 = vpack.c.b16 %v343, %v342
  %vm442 = vcmask 130048
  %v444 = vsel %vm442, %v44, 0
  %446 = vmatprep.subr.bf16.mxu0 0
  %447 = vmatpush1.bf16.msra.mxu0 %v351
  %448 = vmatprep.subr.bf16.mxu0 0
  %449 = vmatpush1.bf16.msra.mxu0 %v350
  %450 = vmatprep.subr.bf16.mxu0 0
  %451 = vmatpush1.bf16.msra.mxu0 %v349
  %452 = vmatprep.subr.bf16.mxu0 0
  %453 = vmatpush1.bf16.msra.mxu0 %v348
  %454 = vmatprep.subr.bf16.mxu0 0
  %455 = vmatpush1.bf16.msra.mxu0 %v347
  %456 = vmatprep.subr.bf16.mxu0 0
  %457 = vmatpush1.bf16.msra.mxu0 %v346
  %458 = vmatprep.subr.bf16.mxu0 0
  %459 = vmatpush1.bf16.msra.mxu0 %v345
  %460 = vmatprep.subr.bf16.mxu0 0
  %461 = vmatpush1.bf16.msra.mxu0 %v344
  %462 = vmatprep.subr.bf16.mxu0 0
  %463 = vmatpush2.bf16.msra.mxu0 %v359
  %464 = vmatprep.subr.bf16.mxu0 0
  %465 = vmatpush2.bf16.msra.mxu0 %v358
  %466 = vmatprep.subr.bf16.mxu0 0
  %467 = vmatpush2.bf16.msra.mxu0 %v357
  %468 = vmatprep.subr.bf16.mxu0 0
  %469 = vmatpush2.bf16.msra.mxu0 %v356
  %470 = vmatprep.subr.bf16.mxu0 0
  %471 = vmatpush2.bf16.msra.mxu0 %v355
  %472 = vmatprep.subr.bf16.mxu0 0
  %473 = vmatpush2.bf16.msra.mxu0 %v354
  %474 = vmatprep.subr.bf16.mxu0 0
  %475 = vmatpush2.bf16.msra.mxu0 %v353
  %476 = vmatprep.subr.bf16.mxu0 0
  %477 = vmatpush2.bf16.msra.mxu0 %v352
  %478 = vmatprep.mubr.bf16.mxu0 %v39
  %479 = vmatmul.mubr.bf16.gmra.mxu0 %v38
  %v480 = vpop.f32.mrf.mxu0
  %v481 = vadd.f32 %v147, %v480
  %v482 = vpop.f32.mrf.mxu0
  %v483 = vpop.f32.mrf.mxu0
  %v484 = vadd.f32 %v147, %v483
  %v485 = vpop.f32.mrf.mxu0
  %486 = vdwg.mxu0
  %487 = vmatprep.subr.bf16.mxu0 0
  %488 = vmatpush1.bf16.msra.mxu0 %v367
  %489 = vmatprep.subr.bf16.mxu0 0
  %490 = vmatpush1.bf16.msra.mxu0 %v366
  %491 = vmatprep.subr.bf16.mxu0 0
  %492 = vmatpush1.bf16.msra.mxu0 %v365
  %493 = vmatprep.subr.bf16.mxu0 0
  %494 = vmatpush1.bf16.msra.mxu0 %v364
  %495 = vmatprep.subr.bf16.mxu0 0
  %496 = vmatpush1.bf16.msra.mxu0 %v363
  %497 = vmatprep.subr.bf16.mxu0 0
  %498 = vmatpush1.bf16.msra.mxu0 %v362
  %499 = vmatprep.subr.bf16.mxu0 0
  %500 = vmatpush1.bf16.msra.mxu0 %v361
  %501 = vmatprep.subr.bf16.mxu0 0
  %502 = vmatpush1.bf16.msra.mxu0 %v360
  %503 = vmatprep.subr.bf16.mxu0 0
  %504 = vmatpush2.bf16.msra.mxu0 %v375
  %505 = vmatprep.subr.bf16.mxu0 0
  %506 = vmatpush2.bf16.msra.mxu0 %v374
  %507 = vmatprep.subr.bf16.mxu0 0
  %508 = vmatpush2.bf16.msra.mxu0 %v373
  %509 = vmatprep.subr.bf16.mxu0 0
  %510 = vmatpush2.bf16.msra.mxu0 %v372
  %511 = vmatprep.subr.bf16.mxu0 0
  %512 = vmatpush2.bf16.msra.mxu0 %v371
  %513 = vmatprep.subr.bf16.mxu0 0
  %514 = vmatpush2.bf16.msra.mxu0 %v370
  %515 = vmatprep.subr.bf16.mxu0 0
  %516 = vmatpush2.bf16.msra.mxu0 %v369
  %517 = vmatprep.subr.bf16.mxu0 0
  %518 = vmatpush2.bf16.msra.mxu0 %v368
  %519 = vmatprep.mubr.bf16.mxu0 %v41
  %520 = vmatmul.mubr.bf16.gmra.mxu0 %v40
  %v521 = vpop.f32.mrf.mxu0
  %v522 = vadd.f32 %v481, %v521
  %v523 = vpop.f32.mrf.mxu0
  %v524 = vpop.f32.mrf.mxu0
  %v525 = vadd.f32 %v484, %v524
  %v526 = vpop.f32.mrf.mxu0
  %527 = vdwg.mxu0
  %528 = vmatprep.subr.bf16.mxu0 0
  %529 = vmatpush1.bf16.msra.mxu0 %v383
  %530 = vmatprep.subr.bf16.mxu0 0
  %531 = vmatpush1.bf16.msra.mxu0 %v382
  %532 = vmatprep.subr.bf16.mxu0 0
  %533 = vmatpush1.bf16.msra.mxu0 %v381
  %534 = vmatprep.subr.bf16.mxu0 0
  %535 = vmatpush1.bf16.msra.mxu0 %v380
  %536 = vmatprep.subr.bf16.mxu0 0
  %537 = vmatpush1.bf16.msra.mxu0 %v379
  %538 = vmatprep.subr.bf16.mxu0 0
  %539 = vmatpush1.bf16.msra.mxu0 %v378
  %540 = vmatprep.subr.bf16.mxu0 0
  %541 = vmatpush1.bf16.msra.mxu0 %v377
  %542 = vmatprep.subr.bf16.mxu0 0
  %543 = vmatpush1.bf16.msra.mxu0 %v376
  %544 = vmatprep.subr.bf16.mxu0 0
  %545 = vmatpush2.bf16.msra.mxu0 %v391
  %546 = vmatprep.subr.bf16.mxu0 0
  %547 = vmatpush2.bf16.msra.mxu0 %v390
  %548 = vmatprep.subr.bf16.mxu0 0
  %549 = vmatpush2.bf16.msra.mxu0 %v389
  %550 = vmatprep.subr.bf16.mxu0 0
  %551 = vmatpush2.bf16.msra.mxu0 %v388
  %552 = vmatprep.subr.bf16.mxu0 0
  %553 = vmatpush2.bf16.msra.mxu0 %v387
  %554 = vmatprep.subr.bf16.mxu0 0
  %555 = vmatpush2.bf16.msra.mxu0 %v386
  %556 = vmatprep.subr.bf16.mxu0 0
  %557 = vmatpush2.bf16.msra.mxu0 %v385
  %558 = vmatprep.subr.bf16.mxu0 0
  %559 = vmatpush2.bf16.msra.mxu0 %v384
  %560 = vmatprep.mubr.bf16.mxu0 %v43
  %561 = vmatmul.mubr.bf16.gmra.mxu0 %v42
  %v562 = vpop.f32.mrf.mxu0
  %v563 = vadd.f32 %v522, %v562
  %v564 = vpop.f32.mrf.mxu0
  %v565 = vpop.f32.mrf.mxu0
  %v566 = vadd.f32 %v525, %v565
  %v567 = vpop.f32.mrf.mxu0
  %568 = vdwg.mxu0
  %569 = vmatprep.subr.bf16.mxu0 0
  %570 = vmatpush1.bf16.msra.mxu0 0
  %571 = vmatprep.subr.bf16.mxu0 0
  %572 = vmatpush1.bf16.msra.mxu0 0
  %573 = vmatprep.subr.bf16.mxu0 0
  %574 = vmatpush1.bf16.msra.mxu0 0
  %575 = vmatprep.subr.bf16.mxu0 0
  %576 = vmatpush1.bf16.msra.mxu0 0
  %577 = vmatprep.subr.bf16.mxu0 0
  %578 = vmatpush1.bf16.msra.mxu0 0
  %579 = vmatprep.subr.bf16.mxu0 0
  %580 = vmatpush1.bf16.msra.mxu0 0
  %581 = vmatprep.subr.bf16.mxu0 0
  %582 = vmatpush1.bf16.msra.mxu0 0
  %583 = vmatprep.subr.bf16.mxu0 0
  %584 = vmatpush1.bf16.msra.mxu0 %v392
  %585 = vmatprep.subr.bf16.mxu0 0
  %586 = vmatpush2.bf16.msra.mxu0 0
  %587 = vmatprep.subr.bf16.mxu0 0
  %588 = vmatpush2.bf16.msra.mxu0 0
  %589 = vmatprep.subr.bf16.mxu0 0
  %590 = vmatpush2.bf16.msra.mxu0 0
  %591 = vmatprep.subr.bf16.mxu0 0
  %592 = vmatpush2.bf16.msra.mxu0 0
  %593 = vmatprep.subr.bf16.mxu0 0
  %594 = vmatpush2.bf16.msra.mxu0 0
  %595 = vmatprep.subr.bf16.mxu0 0
  %596 = vmatpush2.bf16.msra.mxu0 0
  %597 = vmatprep.subr.bf16.mxu0 0
  %598 = vmatpush2.bf16.msra.mxu0 0
  %599 = vmatprep.subr.bf16.mxu0 0
  %600 = vmatpush2.bf16.msra.mxu0 0
  %601 = vmatprep.mubr.bf16.mxu0 0
  %602 = vmatmul.mubr.bf16.gmra.mxu0 %v444
  %v603 = vpop.f32.mrf.mxu0
  %v604 = vadd.f32 %v563, %v603
  %v605 = vpop.f32.mrf.mxu0
  %v606 = vpop.f32.mrf.mxu0
  %v607 = vadd.f32 %v566, %v606
  %v608 = vpop.f32.mrf.mxu0
  %609 = vdwg.mxu0
  %vm610 = vcmp.ge.f32.partialorder %v604, 0.0
  %vm611 = vcmp.ge.f32.partialorder %v607, 0.0
  %v612 = vmul.f32 %v604, 0.2
  %v613 = vmul.f32 %v607, 0.2
  %v614 = vsel %vm610, %v604, %v612
  %v615 = vsel %vm611, %v607, %v613
  %v616 = vpack.c.bf16 %v615, %v614
  %v617 = vld [vmem:[%s2] sm:$0xf]
  %v618 = vld [vmem:[%s2 + $0x4] sm:$0xf]
  %v619 = vld [vmem:[%s2 + $0x8] sm:$0xf]
  %v620 = vld [vmem:[%s2 + $0xc] sm:$0xf]
  %v621 = vld [vmem:[%s2 + $0x10] sm:$0xf]
  %v622 = vld [vmem:[%s2 + $0x14] sm:$0xf]
  %v623 = vld [vmem:[%s2 + $0x18] sm:$0xf]
  %v624 = vld [vmem:[%s2 + $0x1c] sm:$0xf]
  %v625 = vld [vmem:[%s2 + $0x20] sm:$0xf]
  %v626 = vld [vmem:[%s2 + $0x24] sm:$0xf]
  %v627 = vld [vmem:[%s2 + $0x28] sm:$0xf]
  %v628 = vld [vmem:[%s2 + $0x2c] sm:$0xf]
  %v629 = vld [vmem:[%s2 + $0x30] sm:$0xf]
  %v630 = vld [vmem:[%s2 + $0x34] sm:$0xf]
  %v631 = vld [vmem:[%s2 + $0x38] sm:$0xf]
  %v632 = vld [vmem:[%s2 + $0x3c] sm:$0xf]
  %v633 = vld [vmem:[%s5 + $0x1] sm:$0x1]
  %v634 = vlaneseq
  %v635 = vshrl.u32 %v634, 7
  %v636 = vsub.s32 0, %v635
  %v637 = vrot.slane %v633, %v636
  %v654 = vunpack.c.l.b16 %v617
  %v655 = vunpack.c.l.b16 %v618
  %v656 = vunpack.c.l.b16 %v619
  %v657 = vunpack.c.l.b16 %v620
  %v658 = vunpack.c.l.b16 %v621
  %v659 = vunpack.c.l.b16 %v622
  %v660 = vunpack.c.l.b16 %v623
  %v661 = vunpack.c.l.b16 %v624
  %v662 = vunpack.c.l.b16 %v625
  %v663 = vunpack.c.l.b16 %v626
  %v664 = vunpack.c.l.b16 %v627
  %v665 = vunpack.c.l.b16 %v628
  %v666 = vunpack.c.l.b16 %v629
  %v667 = vunpack.c.l.b16 %v630
  %v668 = vunpack.c.l.b16 %v631
  %v669 = vunpack.c.l.b16 %v632
  %v670 = vpack.c.b16 %v655, %v654
  %v671 = vpack.c.b16 %v657, %v656
  %v672 = vpack.c.b16 %v659, %v658
  %v673 = vpack.c.b16 %v661, %v660
  %v674 = vpack.c.b16 %v663, %v662
  %v675 = vpack.c.b16 %v665, %v664
  %v676 = vpack.c.b16 %v667, %v666
  %v677 = vpack.c.b16 %v669, %v668
  %686 = vmatprep.subr.bf16.mxu0 0
  %687 = vmatpush1.bf16.msra.mxu0 %v677
  %688 = vmatprep.subr.bf16.mxu0 0
  %689 = vmatpush1.bf16.msra.mxu0 %v676
  %690 = vmatprep.subr.bf16.mxu0 0
  %691 = vmatpush1.bf16.msra.mxu0 %v675
  %692 = vmatprep.subr.bf16.mxu0 0
  %693 = vmatpush1.bf16.msra.mxu0 %v674
  %694 = vmatprep.subr.bf16.mxu0 0
  %695 = vmatpush1.bf16.msra.mxu0 %v673
  %696 = vmatprep.subr.bf16.mxu0 0
  %697 = vmatpush1.bf16.msra.mxu0 %v672
  %698 = vmatprep.subr.bf16.mxu0 0
  %699 = vmatpush1.bf16.msra.mxu0 %v671
  %700 = vmatprep.subr.bf16.mxu0 0
  %701 = vmatpush1.bf16.msra.mxu0 %v670
  %702 = vmatprep.subr.bf16.mxu0 0
  %703 = vmatpush2.bf16.msra.mxu0 0
  %704 = vmatprep.subr.bf16.mxu0 0
  %705 = vmatpush2.bf16.msra.mxu0 0
  %706 = vmatprep.subr.bf16.mxu0 0
  %707 = vmatpush2.bf16.msra.mxu0 0
  %708 = vmatprep.subr.bf16.mxu0 0
  %709 = vmatpush2.bf16.msra.mxu0 0
  %710 = vmatprep.subr.bf16.mxu0 0
  %711 = vmatpush2.bf16.msra.mxu0 0
  %712 = vmatprep.subr.bf16.mxu0 0
  %713 = vmatpush2.bf16.msra.mxu0 0
  %714 = vmatprep.subr.bf16.mxu0 0
  %715 = vmatpush2.bf16.msra.mxu0 0
  %716 = vmatprep.subr.bf16.mxu0 0
  %717 = vmatpush2.bf16.msra.mxu0 0
  %718 = vmatprep.mubr.bf16.mxu0 0
  %719 = vmatmul.mubr.bf16.gmra.mxu0 %v616
  %v720 = vpop.f32.mrf.mxu0
  %v721 = vadd.f32 %v637, %v720
  %v722 = vpop.f32.mrf.mxu0
  %v723 = vpop.f32.mrf.mxu0
  %v724 = vadd.f32 %v637, %v723
  %v725 = vpop.f32.mrf.mxu0
  %726 = vdwg.mxu0
  %vm727 = vcmp.ge.f32.partialorder %v721, 0.0
  %vm728 = vcmp.ge.f32.partialorder %v724, 0.0
  %v729 = vmul.f32 %v721, 0.2
  %v730 = vmul.f32 %v724, 0.2
  %v731 = vsel %vm727, %v721, %v729
  %v732 = vsel %vm728, %v724, %v730
  %v733 = vpack.c.bf16 %v732, %v731
  %v734 = vld [vmem:[%s3] sm:$0xf]
  %v735 = vld [vmem:[%s3 + $0x4] sm:$0xf]
  %v736 = vld [vmem:[%s3 + $0x8] sm:$0xf]
  %v737 = vld [vmem:[%s3 + $0xc] sm:$0xf]
  %v738 = vld [vmem:[%s3 + $0x10] sm:$0xf]
  %v739 = vld [vmem:[%s3 + $0x14] sm:$0xf]
  %v740 = vld [vmem:[%s3 + $0x18] sm:$0xf]
  %v741 = vld [vmem:[%s3 + $0x1c] sm:$0xf]
  %v742 = vld [vmem:[%s5 + $0x2] sm:$0x1]
  %v743 = vlaneseq
  %v744 = vshrl.u32 %v743, 7
  %v745 = vsub.s32 0, %v744
  %v746 = vrot.slane %v742, %v745
  %v755 = vunpack.c.l.b16 %v734
  %v756 = vunpack.c.l.b16 %v735
  %v757 = vunpack.c.l.b16 %v736
  %v758 = vunpack.c.l.b16 %v737
  %v759 = vunpack.c.l.b16 %v738
  %v760 = vunpack.c.l.b16 %v739
  %v761 = vunpack.c.l.b16 %v740
  %v762 = vunpack.c.l.b16 %v741
  %v763 = vpack.c.b16 %v756, %v755
  %v764 = vpack.c.b16 %v758, %v757
  %v765 = vpack.c.b16 %v760, %v759
  %v766 = vpack.c.b16 %v762, %v761
  %vm771 = vcmask 523264
  %v773 = vsel %vm771, %v733, 0
  %775 = vmatprep.subr.bf16.mxu0 0
  %776 = vmatpush1.bf16.msra.mxu0 0
  %777 = vmatprep.subr.bf16.mxu0 0
  %778 = vmatpush1.bf16.msra.mxu0 0
  %779 = vmatprep.subr.bf16.mxu0 0
  %780 = vmatpush1.bf16.msra.mxu0 0
  %781 = vmatprep.subr.bf16.mxu0 0
  %782 = vmatpush1.bf16.msra.mxu0 0
  %783 = vmatprep.subr.bf16.mxu0 0
  %784 = vmatpush1.bf16.msra.mxu0 %v766
  %785 = vmatprep.subr.bf16.mxu0 0
  %786 = vmatpush1.bf16.msra.mxu0 %v765
  %787 = vmatprep.subr.bf16.mxu0 0
  %788 = vmatpush1.bf16.msra.mxu0 %v764
  %789 = vmatprep.subr.bf16.mxu0 0
  %790 = vmatpush1.bf16.msra.mxu0 %v763
  %791 = vmatprep.subr.bf16.mxu0 0
  %792 = vmatpush2.bf16.msra.mxu0 0
  %793 = vmatprep.subr.bf16.mxu0 0
  %794 = vmatpush2.bf16.msra.mxu0 0
  %795 = vmatprep.subr.bf16.mxu0 0
  %796 = vmatpush2.bf16.msra.mxu0 0
  %797 = vmatprep.subr.bf16.mxu0 0
  %798 = vmatpush2.bf16.msra.mxu0 0
  %799 = vmatprep.subr.bf16.mxu0 0
  %800 = vmatpush2.bf16.msra.mxu0 0
  %801 = vmatprep.subr.bf16.mxu0 0
  %802 = vmatpush2.bf16.msra.mxu0 0
  %803 = vmatprep.subr.bf16.mxu0 0
  %804 = vmatpush2.bf16.msra.mxu0 0
  %805 = vmatprep.subr.bf16.mxu0 0
  %806 = vmatpush2.bf16.msra.mxu0 0
  %807 = vmatprep.mubr.bf16.mxu0 0
  %808 = vmatmul.mubr.bf16.gmra.mxu0 %v773
  %v809 = vpop.f32.mrf.mxu0
  %v810 = vadd.f32 %v746, %v809
  %v811 = vpop.f32.mrf.mxu0
  %v812 = vpop.f32.mrf.mxu0
  %v813 = vadd.f32 %v746, %v812
  %v814 = vpop.f32.mrf.mxu0
  %815 = vdwg.mxu0
  %vm816 = vcmp.ge.f32.partialorder %v810, 0.0
  %vm817 = vcmp.ge.f32.partialorder %v813, 0.0
  %v818 = vmul.f32 %v810, 0.2
  %v819 = vmul.f32 %v813, 0.2
  %v820 = vsel %vm816, %v810, %v818
  %v821 = vsel %vm817, %v813, %v819
  %v822 = vpack.c.bf16 %v821, %v820
  %v823 = vld [vmem:[%s4] sm:$0xf]
  %v824 = vld [vmem:[%s4 + $0x4] sm:$0xf]
  %v825 = vld [vmem:[%s4 + $0x8] sm:$0xf]
  %v826 = vld [vmem:[%s4 + $0xc] sm:$0xf]
  %v827 = vld [vmem:[%s5 + $0x3] sm:$0x1]
  %v828 = vlaneseq
  %v829 = vshrl.u32 %v828, 7
  %v830 = vsub.s32 0, %v829
  %v831 = vrot.slane %v827, %v830
  %v836 = vunpack.c.l.b16 %v823
  %v837 = vunpack.c.l.b16 %v824
  %v838 = vunpack.c.l.b16 %v825
  %v839 = vunpack.c.l.b16 %v826
  %v840 = vpack.c.b16 %v837, %v836
  %v841 = vpack.c.b16 %v839, %v838
  %vm844 = vcmask 261120
  %v846 = vsel %vm844, %v822, 0
  %848 = vmatprep.subr.bf16.mxu0 0
  %849 = vmatpush1.bf16.msra.mxu0 0
  %850 = vmatprep.subr.bf16.mxu0 0
  %851 = vmatpush1.bf16.msra.mxu0 0
  %852 = vmatprep.subr.bf16.mxu0 0
  %853 = vmatpush1.bf16.msra.mxu0 0
  %854 = vmatprep.subr.bf16.mxu0 0
  %855 = vmatpush1.bf16.msra.mxu0 0
  %856 = vmatprep.subr.bf16.mxu0 0
  %857 = vmatpush1.bf16.msra.mxu0 0
  %858 = vmatprep.subr.bf16.mxu0 0
  %859 = vmatpush1.bf16.msra.mxu0 0
  %860 = vmatprep.subr.bf16.mxu0 0
  %861 = vmatpush1.bf16.msra.mxu0 %v841
  %862 = vmatprep.subr.bf16.mxu0 0
  %863 = vmatpush1.bf16.msra.mxu0 %v840
  %864 = vmatprep.subr.bf16.mxu0 0
  %865 = vmatpush2.bf16.msra.mxu0 0
  %866 = vmatprep.subr.bf16.mxu0 0
  %867 = vmatpush2.bf16.msra.mxu0 0
  %868 = vmatprep.subr.bf16.mxu0 0
  %869 = vmatpush2.bf16.msra.mxu0 0
  %870 = vmatprep.subr.bf16.mxu0 0
  %871 = vmatpush2.bf16.msra.mxu0 0
  %872 = vmatprep.subr.bf16.mxu0 0
  %873 = vmatpush2.bf16.msra.mxu0 0
  %874 = vmatprep.subr.bf16.mxu0 0
  %875 = vmatpush2.bf16.msra.mxu0 0
  %876 = vmatprep.subr.bf16.mxu0 0
  %877 = vmatpush2.bf16.msra.mxu0 0
  %878 = vmatprep.subr.bf16.mxu0 0
  %879 = vmatpush2.bf16.msra.mxu0 0
  %880 = vmatprep.mubr.bf16.mxu0 0
  %881 = vmatmul.mubr.bf16.gmra.mxu0 %v846
  %v882 = vpop.f32.mrf.mxu0
  %v883 = vadd.f32 %v831, %v882
  %v884 = vpop.f32.mrf.mxu0
  %v885 = vpop.f32.mrf.mxu0
  %v886 = vadd.f32 %v831, %v885
  %v887 = vpop.f32.mrf.mxu0
  %888 = vdwg.mxu0
  %v889 = vpack.c.bf16 %v886, %v883
  %v891 = vunpack.c.l.b16 %v889
  %v892 = vunpack.c.h.b16 %v889
  %v893 = vpack.c.b16 %v891, %v891
  %v894 = vpack.c.b16 %v892, %v892
  %897 = vst [vmem:[%s6] sm:$0xf] %v893
  %898 = vst [vmem:[%s6 + $0x4] sm:$0xf] %v894
  // Predicated region
  $region26: #{discriminator_forward.1} parent=0 // pred_check
    _
  $region27: #{discriminator_forward.1} parent=0 // pred_check_branch
    %900 = sbr.rel (0) target = $region29
  $region28: #{discriminator_forward.1} parent=0 // pred_region
    _
  $region29: #{discriminator_forward.1} parent=0 // pred_fallthru
    _
  // Predicated region
  $region30: #{discriminator_forward.1} parent=0 // pred_check
    _
  $region31: #{discriminator_forward.1} parent=0 // pred_check_branch
    %902 = sbr.rel (0) target = $region33
  $region32: #{discriminator_forward.1} parent=0 // pred_region
    _
  $region33: #{discriminator_forward.1} parent=0 // pred_fallthru
    _

</llo_original>
